<compile_context>
chip_gen: v6e
topology: v6e:2x2x1
jax: 0.10.0
libtpu: 0.0.40
codegen_flags: <defaults>
</compile_context>

<pallas_src>
import functools

import jax
import jax.numpy as jnp
from jax.experimental import pallas as pl
from jax.experimental.pallas import tpu as pltpu

BN_EPS = 1e-5
ROW_PAD = 16                # bf16 sublane packing for the batch axis
FUSED_MAX_ROWS = 256        # above this, use the batch-gridded path
PREFERRED_BATCH_TILE = 256  # M >= 256 fills the 256-wide MXU on v6e/v7x


def _round_up(n, m):
    return ((n + m - 1) // m) * m


def _cdiv(a, b):
    return (a + b - 1) // b


def _mxu_lane_align():
    """256 for the 2x256^2 MXU (v6e/v7x); 128 for the 4x128^2 MXU (v5e/older)."""
    try:
        kind = jax.devices()[0].device_kind.lower()
        if "v6" in kind or "v7" in kind or "7x" in kind:
            return 256
    except Exception:
        pass
    return 128


def _vmem_budget_bytes():
    """~78% of per-core VMEM (~100 MiB on v5e/v6e, ~50 MiB on v7x)."""
    try:
        cap = int(pltpu.get_tpu_info().vmem_capacity_bytes)
    except Exception:
        cap = 64 << 20
    return int(cap * 0.78)


def _align_feat(d, mxu_align):
    if d <= 128 or mxu_align <= 128:
        return _round_up(d, 128)
    return _round_up(d, mxu_align)


def _pad2d(a, rows, cols, dtype):
    a = jnp.asarray(a, jnp.float32)
    out = jnp.zeros((rows, cols), dtype)
    return out.at[: a.shape[0], : a.shape[1]].set(a.astype(dtype))


# --------------------------------------------------------------------------
# Parameter preparation (hoisted out of the per-call path, cached by caller).
# --------------------------------------------------------------------------
def prepare_params(params):
    """Pad / cast the f32 master weights once.

    Linear weights are stored pre-transposed as [in, out] bf16 (MXU inputs);
    biases / BN params as [1, F] f32 rows (lane broadcast)."""
    mxu = _mxu_lane_align()
    f_in, hidden = params["w1"].shape
    f_out = params["w4"].shape[1]
    f_in_p = _align_feat(f_in, mxu)
    hid_p = _align_feat(hidden, mxu)
    f_out_p = _align_feat(f_out, mxu)

    return {
        "dims": (f_in, hidden, f_out),
        "pdims": (f_in_p, hid_p, f_out_p),
        "w1": _pad2d(params["w1"], f_in_p, hid_p, jnp.bfloat16),
        "w2": _pad2d(params["w2"], hid_p, hid_p, jnp.bfloat16),
        "w3": _pad2d(params["w3"], hid_p, hid_p, jnp.bfloat16),
        "w4": _pad2d(params["w4"], hid_p, f_out_p, jnp.bfloat16),
        "b1": _pad2d(params["b1"], 1, hid_p, jnp.float32),
        "b2": _pad2d(params["b2"], 1, hid_p, jnp.float32),
        "b3": _pad2d(params["b3"], 1, hid_p, jnp.float32),
        "b4": _pad2d(params["b4"], 1, f_out_p, jnp.float32),
        "g1": _pad2d(params["g1"], 1, hid_p, jnp.float32),
        "g2": _pad2d(params["g2"], 1, hid_p, jnp.float32),
        "g3": _pad2d(params["g3"], 1, hid_p, jnp.float32),
        "be1": _pad2d(params["be1"], 1, hid_p, jnp.float32),
        "be2": _pad2d(params["be2"], 1, hid_p, jnp.float32),
        "be3": _pad2d(params["be3"], 1, hid_p, jnp.float32),
    }


# --------------------------------------------------------------------------
# Fused (single-block, VMEM-resident) path for small batches.
# --------------------------------------------------------------------------
def _fused_kernel(nv_ref, invn_ref, x_ref,
                  w1_ref, b1_ref, g1_ref, be1_ref,
                  w2_ref, b2_ref, g2_ref, be2_ref,
                  w3_ref, b3_ref, g3_ref, be3_ref,
                  w4_ref, b4_ref,
                  o_ref, *, has_pad):
    rows = x_ref.shape[0]
    inv_n = invn_ref[...]                                    # (1, 1) f32
    if has_pad:
        row_mask = jax.lax.broadcasted_iota(jnp.int32, (rows, 1), 0) < nv_ref[0]
    else:
        row_mask = None

    def block(h_bf16, w_ref, b_ref, g_ref, be_ref):
        # Linear (bf16 MXU inputs, f32 accumulation) -> ReLU -> BatchNorm1d
        # (training mode, biased variance) -> Dropout (identity).
        h = jnp.dot(h_bf16, w_ref[...],
                    preferred_element_type=jnp.float32) + b_ref[...]
        h = jnp.maximum(h, 0.0)
        # Two-pass (centered) statistics folded into a single scale/shift.
        if row_mask is None:
            mean = jnp.sum(h, axis=0, keepdims=True) * inv_n
            d = h - mean
        else:
            hm = jnp.where(row_mask, h, 0.0)
            mean = jnp.sum(hm, axis=0, keepdims=True) * inv_n
            d = jnp.where(row_mask, h - mean, 0.0)
        var = jnp.sum(d * d, axis=0, keepdims=True) * inv_n
        scale = g_ref[...] * jax.lax.rsqrt(var + BN_EPS)
        shift = be_ref[...] - mean * scale
        return (h * scale + shift).astype(jnp.bfloat16)

    h = block(x_ref[...], w1_ref, b1_ref, g1_ref, be1_ref)
    h = block(h, w2_ref, b2_ref, g2_ref, be2_ref)
    h = block(h, w3_ref, b3_ref, g3_ref, be3_ref)
    out = jnp.dot(h, w4_ref[...],
                  preferred_element_type=jnp.float32) + b4_ref[...]
    o_ref[...] = out.astype(o_ref.dtype)


def _fused_forward(x, prep, out_dtype, vmem_limit):
    B, _ = x.shape
    f_in_p, hid_p, f_out_p = prep["pdims"]
    bp = _round_up(B, ROW_PAD)

    xp = _pad2d(x, bp, f_in_p, jnp.bfloat16)
    inputs = (xp,
              prep["w1"], prep["b1"], prep["g1"], prep["be1"],
              prep["w2"], prep["b2"], prep["g2"], prep["be2"],
              prep["w3"], prep["b3"], prep["g3"], prep["be3"],
              prep["w4"], prep["b4"])
    invn = jnp.full((1, 1), 1.0 / B, jnp.float32)

    def full_spec(shape):
        return pl.BlockSpec(shape, lambda i, nv: (0, 0))

    in_specs = [full_spec(invn.shape)] + [full_spec(a.shape) for a in inputs]

    in_bytes = invn.size * 4 + sum(int(a.size) * a.dtype.itemsize for a in inputs)
    out_bytes = bp * f_out_p * jnp.dtype(out_dtype).itemsize
    flops = 2 * bp * (f_in_p * hid_p + 2 * hid_p * hid_p + hid_p * f_out_p)
    cost = pl.CostEstimate(flops=int(flops), transcendentals=int(3 * hid_p),
                           bytes_accessed=int(in_bytes + out_bytes))

    out = pl.pallas_call(
        functools.partial(_fused_kernel, has_pad=(bp != B)),
        out_shape=jax.ShapeDtypeStruct((bp, f_out_p), out_dtype),
        grid_spec=pltpu.PrefetchScalarGridSpec(
            num_scalar_prefetch=1,
            grid=(1,),
            in_specs=in_specs,
            out_specs=full_spec((bp, f_out_p)),
        ),
        compiler_params=pltpu.CompilerParams(
            dimension_semantics=("arbitrary",),
            vmem_limit_bytes=int(vmem_limit)),
        cost_estimate=cost,
    )(jnp.array([B], jnp.int32), invn, *inputs)
    return out


# --------------------------------------------------------------------------
# Batch-gridded path: resident weights, pipelined activation tiles,
# per-tile BN partial statistics + JAX-level Chan combine.
# --------------------------------------------------------------------------
def _layer_stats_kernel(nv_ref, hin_ref, scale_ref, shift_ref, invc_ref,
                        w_ref, b_ref, hout_ref, s1_ref, m2_ref, *, tb):
    # Normalize previous layer (folded scale/shift), Linear + ReLU, emit
    # per-tile centered partial statistics for this layer's BatchNorm.
    h = hin_ref[...].astype(jnp.float32) * scale_ref[...] + shift_ref[...]
    acc = jnp.dot(h.astype(jnp.bfloat16), w_ref[...],
                  preferred_element_type=jnp.float32) + b_ref[...]
    acc = jnp.maximum(acc, 0.0)

    rows = pl.program_id(0) * tb + jax.lax.broadcasted_iota(jnp.int32, (tb, 1), 0)
    mask = rows < nv_ref[0]
    hm = jnp.where(mask, acc, 0.0)
    s1 = jnp.sum(hm, axis=0, keepdims=True)                  # (1, F)
    tile_mean = s1 * invc_ref[0]                             # (1, F)
    d = jnp.where(mask, acc - tile_mean, 0.0)
    m2 = jnp.sum(d * d, axis=0, keepdims=True)

    hout_ref[...] = acc
    s1_ref[0] = s1
    m2_ref[0] = m2


def _final_layer_kernel(nv_ref, hin_ref, scale_ref, shift_ref, w_ref, b_ref,
                        o_ref):
    del nv_ref
    h = hin_ref[...] * scale_ref[...] + shift_ref[...]
    acc = jnp.dot(h.astype(jnp.bfloat16), w_ref[...],
                  preferred_element_type=jnp.float32) + b_ref[...]
    o_ref[...] = acc.astype(o_ref.dtype)


def _stats_layer_call(nv, h_in, scale, shift, inv_counts, w, b, *, tb, n_tiles,
                      vmem_limit):
    bp, fin = h_in.shape
    fout = w.shape[1]
    in_specs = [
        pl.BlockSpec((tb, fin), lambda i, nv: (i, 0)),      # activation tile
        pl.BlockSpec((1, fin), lambda i, nv: (0, 0)),       # scale (resident)
        pl.BlockSpec((1, fin), lambda i, nv: (0, 0)),       # shift (resident)
        pl.BlockSpec((1, 1, 1), lambda i, nv: (i, 0, 0)),   # 1/count per tile
        pl.BlockSpec((fin, fout), lambda i, nv: (0, 0)),    # weight (resident)
        pl.BlockSpec((1, fout), lambda i, nv: (0, 0)),      # bias (resident)
    ]
    out_shape = (
        jax.ShapeDtypeStruct((bp, fout), jnp.float32),         # pre-BN acts
        jax.ShapeDtypeStruct((n_tiles, 1, fout), jnp.float32),  # per-tile sum
        jax.ShapeDtypeStruct((n_tiles, 1, fout), jnp.float32),  # per-tile M2
    )
    out_specs = (
        pl.BlockSpec((tb, fout), lambda i, nv: (i, 0)),
        pl.BlockSpec((1, 1, fout), lambda i, nv: (i, 0, 0)),
        pl.BlockSpec((1, 1, fout), lambda i, nv: (i, 0, 0)),
    )
    in_bytes = sum(int(a.size) * a.dtype.itemsize
                   for a in (h_in, scale, shift, inv_counts, w, b))
    out_bytes = bp * fout * 4 + 2 * n_tiles * fout * 4
    cost = pl.CostEstimate(flops=int(2 * bp * fin * fout), transcendentals=0,
                           bytes_accessed=int(in_bytes + out_bytes))
    return pl.pallas_call(
        functools.partial(_layer_stats_kernel, tb=tb),
        out_shape=out_shape,
        grid_spec=pltpu.PrefetchScalarGridSpec(
            num_scalar_prefetch=1,
            grid=(n_tiles,),
            in_specs=in_specs,
            out_specs=out_specs,
        ),
        compiler_params=pltpu.CompilerParams(
            dimension_semantics=("parallel",),
            vmem_limit_bytes=int(vmem_limit)),
        cost_estimate=cost,
    )(nv, h_in, scale, shift, inv_counts, w, b)


def _final_layer_call(nv, h_in, scale, shift, w, b, *, tb, n_tiles, out_dtype,
                      vmem_limit):
    bp, fin = h_in.shape
    fout = w.shape[1]
    in_specs = [
        pl.BlockSpec((tb, fin), lambda i, nv: (i, 0)),
        pl.BlockSpec((1, fin), lambda i, nv: (0, 0)),
        pl.BlockSpec((1, fin), lambda i, nv: (0, 0)),
        pl.BlockSpec((fin, fout), lambda i, nv: (0, 0)),
        pl.BlockSpec((1, fout), lambda i, nv: (0, 0)),
    ]
    in_bytes = sum(int(a.size) * a.dtype.itemsize
                   for a in (h_in, scale, shift, w, b))
    out_bytes = bp * fout * jnp.dtype(out_dtype).itemsize
    cost = pl.CostEstimate(flops=int(2 * bp * fin * fout), transcendentals=0,
                           bytes_accessed=int(in_bytes + out_bytes))
    return pl.pallas_call(
        _final_layer_kernel,
        out_shape=jax.ShapeDtypeStruct((bp, fout), out_dtype),
        grid_spec=pltpu.PrefetchScalarGridSpec(
            num_scalar_prefetch=1,
            grid=(n_tiles,),
            in_specs=in_specs,
            out_specs=pl.BlockSpec((tb, fout), lambda i, nv: (i, 0)),
        ),
        compiler_params=pltpu.CompilerParams(
            dimension_semantics=("parallel",),
            vmem_limit_bytes=int(vmem_limit)),
        cost_estimate=cost,
    )(nv, h_in, scale, shift, w, b)


def _combine_bn(s1, m2, counts, n_valid, gamma, beta):
    """Chan-style combine of per-tile centered stats -> folded scale/shift."""
    total = jnp.float32(n_valid)
    mean = jnp.sum(s1, axis=0) / total                       # (1, F)
    tile_mean = s1 / jnp.maximum(counts, 1.0)                # (n_tiles, 1, F)
    m2_total = (jnp.sum(m2, axis=0)
                + jnp.sum(counts * jnp.square(tile_mean - mean), axis=0))
    var = m2_total / total                                   # biased (train mode)
    scale = gamma * jax.lax.rsqrt(var + BN_EPS)
    shift = beta - mean * scale
    return scale, shift


def _gridded_forward(x, prep, out_dtype, vmem_limit):
    B, _ = x.shape
    f_in_p, _, _ = prep["pdims"]

    n_tiles = max(2, _cdiv(B, PREFERRED_BATCH_TILE))
    tb = _round_up(_cdiv(B, n_tiles), ROW_PAD)
    bp = n_tiles * tb

    xp = _pad2d(x, bp, f_in_p, jnp.bfloat16)
    nv = jnp.array([B], jnp.int32)
    counts = jnp.clip(jnp.float32(B)
                      - jnp.arange(n_tiles, dtype=jnp.float32) * tb,
                      0.0, float(tb)).reshape(n_tiles, 1, 1)
    inv_counts = 1.0 / jnp.maximum(counts, 1.0)

    ident_scale = jnp.ones((1, f_in_p), jnp.float32)
    ident_shift = jnp.zeros((1, f_in_p), jnp.float32)

    h1, s1, m2 = _stats_layer_call(nv, xp, ident_scale, ident_shift, inv_counts,
                                   prep["w1"], prep["b1"], tb=tb,
                                   n_tiles=n_tiles, vmem_limit=vmem_limit)
    sc1, sh1 = _combine_bn(s1, m2, counts, B, prep["g1"], prep["be1"])

    h2, s1, m2 = _stats_layer_call(nv, h1, sc1, sh1, inv_counts,
                                   prep["w2"], prep["b2"], tb=tb,
                                   n_tiles=n_tiles, vmem_limit=vmem_limit)
    sc2, sh2 = _combine_bn(s1, m2, counts, B, prep["g2"], prep["be2"])

    h3, s1, m2 = _stats_layer_call(nv, h2, sc2, sh2, inv_counts,
                                   prep["w3"], prep["b3"], tb=tb,
                                   n_tiles=n_tiles, vmem_limit=vmem_limit)
    sc3, sh3 = _combine_bn(s1, m2, counts, B, prep["g3"], prep["be3"])

    return _final_layer_call(nv, h3, sc3, sh3, prep["w4"], prep["b4"],
                             tb=tb, n_tiles=n_tiles, out_dtype=out_dtype,
                             vmem_limit=vmem_limit)


# --------------------------------------------------------------------------
# Public forward.
# --------------------------------------------------------------------------
def chat_model_v3_extended_forward(x, prepared, out_dtype=jnp.float32,
                                   force_gridded=False):
    """x: [B, input_feature] f32; `prepared` from prepare_params() (cached).

    Set out_dtype=jnp.bfloat16 to halve output writeback bytes (v5e)."""
    B, f_in = x.shape
    f_in_orig, _, f_out = prepared["dims"]
    assert f_in == f_in_orig, "input feature mismatch"
    f_in_p, hid_p, f_out_p = prepared["pdims"]
    vmem_limit = _vmem_budget_bytes()

    bp = _round_up(B, ROW_PAD)
    param_keys = ("w1", "w2", "w3", "w4", "b1", "b2", "b3", "b4",
                  "g1", "g2", "g3", "be1", "be2", "be3")
    weight_bytes = sum(int(prepared[k].size) * prepared[k].dtype.itemsize
                       for k in param_keys)
    fused_bytes = (weight_bytes + bp * f_in_p * 2 + bp * f_out_p * 4
                   + 4 * bp * hid_p * 4)
    use_fused = (not force_gridded and bp <= FUSED_MAX_ROWS
                 and 2 * fused_bytes < vmem_limit)

    if use_fused:
        out = _fused_forward(x, prepared, out_dtype, vmem_limit)
    else:
        out = _gridded_forward(x, prepared, out_dtype, vmem_limit)
    return out[:B, :f_out]


# --------------------------------------------------------------------------
# Synthetic init + pure-JAX reference.
# --------------------------------------------------------------------------
def init_params(key, input_feature, hidden_feature, out_feature):
    """Synthetic init matching nn.Linear / nn.BatchNorm1d shapes (f32 masters,
    Linear weights pre-transposed to [in, out], row vectors as [1, F])."""
    ks = jax.random.split(key, 8)

    def lin(kw, kb, fan_in, fan_out):
        bound = 1.0 / (fan_in ** 0.5)
        w = jax.random.uniform(kw, (fan_in, fan_out), jnp.float32, -bound, bound)
        b = jax.random.uniform(kb, (1, fan_out), jnp.float32, -bound, bound)
        return w, b

    w1, b1 = lin(ks[0], ks[1], input_feature, hidden_feature)
    w2, b2 = lin(ks[2], ks[3], hidden_feature, hidden_feature)
    w3, b3 = lin(ks[4], ks[5], hidden_feature, hidden_feature)
    w4, b4 = lin(ks[6], ks[7], hidden_feature, out_feature)

    ones = jnp.ones((1, hidden_feature), jnp.float32)
    zeros = jnp.zeros((1, hidden_feature), jnp.float32)
    return dict(
        w1=w1, b1=b1, g1=ones, be1=zeros,
        w2=w2, b2=b2, g2=ones, be2=zeros,
        w3=w3, b3=b3, g3=ones, be3=zeros,
        w4=w4, b4=b4,
    )


def _reference_forward(x, p, eps=BN_EPS):
    """Pure-JAX reference mirroring the kernel numerics (bf16 MXU inputs,
    f32 accumulation, training-mode BatchNorm, dropout as identity)."""
    def lin(h, w, b):
        return jnp.dot(h.astype(jnp.bfloat16), w.astype(jnp.bfloat16),
                       preferred_element_type=jnp.float32) + b

    def bn(h, g, b):
        m = jnp.mean(h, axis=0, keepdims=True)
        v = jnp.mean((h - m) ** 2, axis=0, keepdims=True)
        return g * (h - m) * jax.lax.rsqrt(v + eps) + b

    h = bn(jnp.maximum(lin(x, p["w1"], p["b1"]), 0.0), p["g1"], p["be1"])
    h = bn(jnp.maximum(lin(h, p["w2"], p["b2"]), 0.0), p["g2"], p["be2"])
    h = bn(jnp.maximum(lin(h, p["w3"], p["b3"]), 0.0), p["g3"], p["be3"])
    return lin(h, p["w4"], p["b4"])


if __name__ == "__main__":
    INPUT, HIDDEN, OUT = 16, 32, 8

    key = jax.random.PRNGKey(0)
    k_x1, k_x2, k_p = jax.random.split(key, 3)
    params = init_params(k_p, INPUT, HIDDEN, OUT)
    prepared = prepare_params(params)          # pad/cast once, reused per call

    # Fused (VMEM-resident) path: small batch with padded rows masked from BN.
    B1 = 8
    x1 = jax.random.normal(k_x1, (B1, INPUT), jnp.float32)
    out1 = jax.block_until_ready(chat_model_v3_extended_forward(x1, prepared))
    ref1 = _reference_forward(x1, params)
    assert out1.shape == (B1, OUT)
    assert jnp.allclose(out1, ref1, atol=1e-2, rtol=1e-2), "fused path mismatch"

    # Batch-gridded path (resident weights, per-tile BN stats + Chan combine),
    # exercised at a small shape with a ragged last tile.
    B2 = 24
    x2 = jax.random.normal(k_x2, (B2, INPUT), jnp.float32)
    out2 = jax.block_until_ready(
        chat_model_v3_extended_forward(x2, prepared, force_gridded=True))
    ref2 = _reference_forward(x2, params)
    assert out2.shape == (B2, OUT)
    assert jnp.allclose(out2, ref2, atol=1e-2, rtol=1e-2), "gridded path mismatch"

    print("KERNEL_OK")
</pallas_src>

<mosaic_0001>
module attributes {stable_mosaic.version = 11 : i64} {
  func.func @_fused_kernel(%arg0: i32, %arg1: memref<1xi32, #tpu.memory_space<smem>>, %arg2: memref<1x1xf32, #tpu.memory_space<vmem>>, %arg3: memref<16x128xbf16, #tpu.memory_space<vmem>>, %arg4: memref<128x128xbf16, #tpu.memory_space<vmem>>, %arg5: memref<1x128xf32, #tpu.memory_space<vmem>>, %arg6: memref<1x128xf32, #tpu.memory_space<vmem>>, %arg7: memref<1x128xf32, #tpu.memory_space<vmem>>, %arg8: memref<128x128xbf16, #tpu.memory_space<vmem>>, %arg9: memref<1x128xf32, #tpu.memory_space<vmem>>, %arg10: memref<1x128xf32, #tpu.memory_space<vmem>>, %arg11: memref<1x128xf32, #tpu.memory_space<vmem>>, %arg12: memref<128x128xbf16, #tpu.memory_space<vmem>>, %arg13: memref<1x128xf32, #tpu.memory_space<vmem>>, %arg14: memref<1x128xf32, #tpu.memory_space<vmem>>, %arg15: memref<1x128xf32, #tpu.memory_space<vmem>>, %arg16: memref<128x128xbf16, #tpu.memory_space<vmem>>, %arg17: memref<1x128xf32, #tpu.memory_space<vmem>>, %arg18: memref<16x128xf32, #tpu.memory_space<vmem>>) attributes {dimension_semantics = [#tpu.dimension_semantics<arbitrary>], iteration_bounds = array<i64: 1>, scalar_prefetch = 1 : i64, scratch_operands = 0 : i64, tpu.core_type = #tpu.core_type<tc>, window_params = [{pipeline_mode = #tpu.pipeline_mode<synchronous>, transform_indices = @transform_0, window_bounds = array<i64: 1, 1>}, {pipeline_mode = #tpu.pipeline_mode<synchronous>, transform_indices = @transform_1, window_bounds = array<i64: 16, 128>}, {pipeline_mode = #tpu.pipeline_mode<synchronous>, transform_indices = @transform_2, window_bounds = array<i64: 128, 128>}, {pipeline_mode = #tpu.pipeline_mode<synchronous>, transform_indices = @transform_3, window_bounds = array<i64: 1, 128>}, {pipeline_mode = #tpu.pipeline_mode<synchronous>, transform_indices = @transform_4, window_bounds = array<i64: 1, 128>}, {pipeline_mode = #tpu.pipeline_mode<synchronous>, transform_indices = @transform_5, window_bounds = array<i64: 1, 128>}, {pipeline_mode = #tpu.pipeline_mode<synchronous>, transform_indices = @transform_6, window_bounds = array<i64: 128, 128>}, {pipeline_mode = #tpu.pipeline_mode<synchronous>, transform_indices = @transform_7, window_bounds = array<i64: 1, 128>}, {pipeline_mode = #tpu.pipeline_mode<synchronous>, transform_indices = @transform_8, window_bounds = array<i64: 1, 128>}, {pipeline_mode = #tpu.pipeline_mode<synchronous>, transform_indices = @transform_9, window_bounds = array<i64: 1, 128>}, {pipeline_mode = #tpu.pipeline_mode<synchronous>, transform_indices = @transform_10, window_bounds = array<i64: 128, 128>}, {pipeline_mode = #tpu.pipeline_mode<synchronous>, transform_indices = @transform_11, window_bounds = array<i64: 1, 128>}, {pipeline_mode = #tpu.pipeline_mode<synchronous>, transform_indices = @transform_12, window_bounds = array<i64: 1, 128>}, {pipeline_mode = #tpu.pipeline_mode<synchronous>, transform_indices = @transform_13, window_bounds = array<i64: 1, 128>}, {pipeline_mode = #tpu.pipeline_mode<synchronous>, transform_indices = @transform_14, window_bounds = array<i64: 128, 128>}, {pipeline_mode = #tpu.pipeline_mode<synchronous>, transform_indices = @transform_15, window_bounds = array<i64: 1, 128>}, {pipeline_mode = #tpu.pipeline_mode<synchronous>, transform_indices = @transform_16, window_bounds = array<i64: 16, 128>}]} {
    %c0 = arith.constant 0 : index
    %c0_0 = arith.constant 0 : index
    %0 = vector.load %arg2[%c0, %c0_0] : memref<1x1xf32, #tpu.memory_space<vmem>>, vector<1x1xf32>
    %1 = tpu.iota {dimensions = array<i32: 0>} : vector<16x1xi32>
    %c0_1 = arith.constant 0 : index
    %2 = memref.load %arg1[%c0_1] : memref<1xi32, #tpu.memory_space<smem>>
    %3 = vector.broadcast %2 : i32 to vector<16x1xi32>
    %4 = arith.cmpi slt, %1, %3 : vector<16x1xi32>
    %c0_2 = arith.constant 0 : index
    %c0_3 = arith.constant 0 : index
    %5 = vector.load %arg3[%c0_2, %c0_3] : memref<16x128xbf16, #tpu.memory_space<vmem>>, vector<16x128xbf16>
    %c0_4 = arith.constant 0 : index
    %c0_5 = arith.constant 0 : index
    %6 = vector.load %arg4[%c0_4, %c0_5] : memref<128x128xbf16, #tpu.memory_space<vmem>>, vector<128x128xbf16>
    %cst = arith.constant dense<0.000000e+00> : vector<16x128xf32>
    %7 = tpu.matmul %5, %6, %cst {dimension_numbers = #tpu.dot_dimension_numbers<[1], [0], [0], [1], [0, 0, 1, 1], [], []>} : vector<16x128xbf16>, vector<128x128xbf16>, vector<16x128xf32> -> vector<16x128xf32>
    %c0_6 = arith.constant 0 : index
    %c0_7 = arith.constant 0 : index
    %8 = vector.load %arg5[%c0_6, %c0_7] : memref<1x128xf32, #tpu.memory_space<vmem>>, vector<1x128xf32>
    %9 = vector.broadcast %8 : vector<1x128xf32> to vector<16x128xf32>
    %10 = arith.addf %7, %9 : vector<16x128xf32>
    %cst_8 = arith.constant 0.000000e+00 : f32
    %11 = vector.broadcast %cst_8 : f32 to vector<16x128xf32>
    %12 = arith.maximumf %10, %11 : vector<16x128xf32>
    %cst_9 = arith.constant 0.000000e+00 : f32
    %13 = vector.shape_cast %4 : vector<16x1xi1> to vector<16x1xi1>
    %14 = vector.broadcast %13 : vector<16x1xi1> to vector<16x128xi1>
    %15 = vector.broadcast %cst_9 : f32 to vector<16x128xf32>
    %16 = arith.select %14, %12, %15 : vector<16x128xi1>, vector<16x128xf32>
    %cst_10 = arith.constant dense<0.000000e+00> : vector<128xf32>
    %17 = vector.multi_reduction <add>, %16, %cst_10 [0] : vector<16x128xf32> to vector<128xf32>
    %18 = vector.shape_cast %17 : vector<128xf32> to vector<1x128xf32>
    %19 = vector.broadcast %0 : vector<1x1xf32> to vector<1x128xf32>
    %20 = arith.mulf %18, %19 : vector<1x128xf32>
    %21 = vector.broadcast %20 : vector<1x128xf32> to vector<16x128xf32>
    %22 = arith.subf %12, %21 : vector<16x128xf32>
    %cst_11 = arith.constant 0.000000e+00 : f32
    %23 = vector.shape_cast %4 : vector<16x1xi1> to vector<16x1xi1>
    %24 = vector.broadcast %23 : vector<16x1xi1> to vector<16x128xi1>
    %25 = vector.broadcast %cst_11 : f32 to vector<16x128xf32>
    %26 = arith.select %24, %22, %25 : vector<16x128xi1>, vector<16x128xf32>
    %27 = arith.mulf %26, %26 : vector<16x128xf32>
    %cst_12 = arith.constant dense<0.000000e+00> : vector<128xf32>
    %28 = vector.multi_reduction <add>, %27, %cst_12 [0] : vector<16x128xf32> to vector<128xf32>
    %29 = vector.shape_cast %28 : vector<128xf32> to vector<1x128xf32>
    %30 = vector.broadcast %0 : vector<1x1xf32> to vector<1x128xf32>
    %31 = arith.mulf %29, %30 : vector<1x128xf32>
    %c0_13 = arith.constant 0 : index
    %c0_14 = arith.constant 0 : index
    %32 = vector.load %arg6[%c0_13, %c0_14] : memref<1x128xf32, #tpu.memory_space<vmem>>, vector<1x128xf32>
    %cst_15 = arith.constant 9.99999974E-6 : f32
    %33 = vector.broadcast %cst_15 : f32 to vector<1x128xf32>
    %34 = arith.addf %31, %33 : vector<1x128xf32>
    %35 = math.rsqrt %34 : vector<1x128xf32>
    %36 = arith.mulf %32, %35 : vector<1x128xf32>
    %c0_16 = arith.constant 0 : index
    %c0_17 = arith.constant 0 : index
    %37 = vector.load %arg7[%c0_16, %c0_17] : memref<1x128xf32, #tpu.memory_space<vmem>>, vector<1x128xf32>
    %38 = arith.mulf %20, %36 : vector<1x128xf32>
    %39 = arith.subf %37, %38 : vector<1x128xf32>
    %40 = vector.broadcast %36 : vector<1x128xf32> to vector<16x128xf32>
    %41 = arith.mulf %12, %40 : vector<16x128xf32>
    %42 = vector.broadcast %39 : vector<1x128xf32> to vector<16x128xf32>
    %43 = arith.addf %41, %42 : vector<16x128xf32>
    %44 = arith.truncf %43 : vector<16x128xf32> to vector<16x128xbf16>
    %c0_18 = arith.constant 0 : index
    %c0_19 = arith.constant 0 : index
    %45 = vector.load %arg8[%c0_18, %c0_19] : memref<128x128xbf16, #tpu.memory_space<vmem>>, vector<128x128xbf16>
    %cst_20 = arith.constant dense<0.000000e+00> : vector<16x128xf32>
    %46 = tpu.matmul %44, %45, %cst_20 {dimension_numbers = #tpu.dot_dimension_numbers<[1], [0], [0], [1], [0, 0, 1, 1], [], []>} : vector<16x128xbf16>, vector<128x128xbf16>, vector<16x128xf32> -> vector<16x128xf32>
    %c0_21 = arith.constant 0 : index
    %c0_22 = arith.constant 0 : index
    %47 = vector.load %arg9[%c0_21, %c0_22] : memref<1x128xf32, #tpu.memory_space<vmem>>, vector<1x128xf32>
    %48 = vector.broadcast %47 : vector<1x128xf32> to vector<16x128xf32>
    %49 = arith.addf %46, %48 : vector<16x128xf32>
    %cst_23 = arith.constant 0.000000e+00 : f32
    %50 = vector.broadcast %cst_23 : f32 to vector<16x128xf32>
    %51 = arith.maximumf %49, %50 : vector<16x128xf32>
    %cst_24 = arith.constant 0.000000e+00 : f32
    %52 = vector.shape_cast %4 : vector<16x1xi1> to vector<16x1xi1>
    %53 = vector.broadcast %52 : vector<16x1xi1> to vector<16x128xi1>
    %54 = vector.broadcast %cst_24 : f32 to vector<16x128xf32>
    %55 = arith.select %53, %51, %54 : vector<16x128xi1>, vector<16x128xf32>
    %cst_25 = arith.constant dense<0.000000e+00> : vector<128xf32>
    %56 = vector.multi_reduction <add>, %55, %cst_25 [0] : vector<16x128xf32> to vector<128xf32>
    %57 = vector.shape_cast %56 : vector<128xf32> to vector<1x128xf32>
    %58 = vector.broadcast %0 : vector<1x1xf32> to vector<1x128xf32>
    %59 = arith.mulf %57, %58 : vector<1x128xf32>
    %60 = vector.broadcast %59 : vector<1x128xf32> to vector<16x128xf32>
    %61 = arith.subf %51, %60 : vector<16x128xf32>
    %cst_26 = arith.constant 0.000000e+00 : f32
    %62 = vector.shape_cast %4 : vector<16x1xi1> to vector<16x1xi1>
    %63 = vector.broadcast %62 : vector<16x1xi1> to vector<16x128xi1>
    %64 = vector.broadcast %cst_26 : f32 to vector<16x128xf32>
    %65 = arith.select %63, %61, %64 : vector<16x128xi1>, vector<16x128xf32>
    %66 = arith.mulf %65, %65 : vector<16x128xf32>
    %cst_27 = arith.constant dense<0.000000e+00> : vector<128xf32>
    %67 = vector.multi_reduction <add>, %66, %cst_27 [0] : vector<16x128xf32> to vector<128xf32>
    %68 = vector.shape_cast %67 : vector<128xf32> to vector<1x128xf32>
    %69 = vector.broadcast %0 : vector<1x1xf32> to vector<1x128xf32>
    %70 = arith.mulf %68, %69 : vector<1x128xf32>
    %c0_28 = arith.constant 0 : index
    %c0_29 = arith.constant 0 : index
    %71 = vector.load %arg10[%c0_28, %c0_29] : memref<1x128xf32, #tpu.memory_space<vmem>>, vector<1x128xf32>
    %cst_30 = arith.constant 9.99999974E-6 : f32
    %72 = vector.broadcast %cst_30 : f32 to vector<1x128xf32>
    %73 = arith.addf %70, %72 : vector<1x128xf32>
    %74 = math.rsqrt %73 : vector<1x128xf32>
    %75 = arith.mulf %71, %74 : vector<1x128xf32>
    %c0_31 = arith.constant 0 : index
    %c0_32 = arith.constant 0 : index
    %76 = vector.load %arg11[%c0_31, %c0_32] : memref<1x128xf32, #tpu.memory_space<vmem>>, vector<1x128xf32>
    %77 = arith.mulf %59, %75 : vector<1x128xf32>
    %78 = arith.subf %76, %77 : vector<1x128xf32>
    %79 = vector.broadcast %75 : vector<1x128xf32> to vector<16x128xf32>
    %80 = arith.mulf %51, %79 : vector<16x128xf32>
    %81 = vector.broadcast %78 : vector<1x128xf32> to vector<16x128xf32>
    %82 = arith.addf %80, %81 : vector<16x128xf32>
    %83 = arith.truncf %82 : vector<16x128xf32> to vector<16x128xbf16>
    %c0_33 = arith.constant 0 : index
    %c0_34 = arith.constant 0 : index
    %84 = vector.load %arg12[%c0_33, %c0_34] : memref<128x128xbf16, #tpu.memory_space<vmem>>, vector<128x128xbf16>
    %cst_35 = arith.constant dense<0.000000e+00> : vector<16x128xf32>
    %85 = tpu.matmul %83, %84, %cst_35 {dimension_numbers = #tpu.dot_dimension_numbers<[1], [0], [0], [1], [0, 0, 1, 1], [], []>} : vector<16x128xbf16>, vector<128x128xbf16>, vector<16x128xf32> -> vector<16x128xf32>
    %c0_36 = arith.constant 0 : index
    %c0_37 = arith.constant 0 : index
    %86 = vector.load %arg13[%c0_36, %c0_37] : memref<1x128xf32, #tpu.memory_space<vmem>>, vector<1x128xf32>
    %87 = vector.broadcast %86 : vector<1x128xf32> to vector<16x128xf32>
    %88 = arith.addf %85, %87 : vector<16x128xf32>
    %cst_38 = arith.constant 0.000000e+00 : f32
    %89 = vector.broadcast %cst_38 : f32 to vector<16x128xf32>
    %90 = arith.maximumf %88, %89 : vector<16x128xf32>
    %cst_39 = arith.constant 0.000000e+00 : f32
    %91 = vector.shape_cast %4 : vector<16x1xi1> to vector<16x1xi1>
    %92 = vector.broadcast %91 : vector<16x1xi1> to vector<16x128xi1>
    %93 = vector.broadcast %cst_39 : f32 to vector<16x128xf32>
    %94 = arith.select %92, %90, %93 : vector<16x128xi1>, vector<16x128xf32>
    %cst_40 = arith.constant dense<0.000000e+00> : vector<128xf32>
    %95 = vector.multi_reduction <add>, %94, %cst_40 [0] : vector<16x128xf32> to vector<128xf32>
    %96 = vector.shape_cast %95 : vector<128xf32> to vector<1x128xf32>
    %97 = vector.broadcast %0 : vector<1x1xf32> to vector<1x128xf32>
    %98 = arith.mulf %96, %97 : vector<1x128xf32>
    %99 = vector.broadcast %98 : vector<1x128xf32> to vector<16x128xf32>
    %100 = arith.subf %90, %99 : vector<16x128xf32>
    %cst_41 = arith.constant 0.000000e+00 : f32
    %101 = vector.shape_cast %4 : vector<16x1xi1> to vector<16x1xi1>
    %102 = vector.broadcast %101 : vector<16x1xi1> to vector<16x128xi1>
    %103 = vector.broadcast %cst_41 : f32 to vector<16x128xf32>
    %104 = arith.select %102, %100, %103 : vector<16x128xi1>, vector<16x128xf32>
    %105 = arith.mulf %104, %104 : vector<16x128xf32>
    %cst_42 = arith.constant dense<0.000000e+00> : vector<128xf32>
    %106 = vector.multi_reduction <add>, %105, %cst_42 [0] : vector<16x128xf32> to vector<128xf32>
    %107 = vector.shape_cast %106 : vector<128xf32> to vector<1x128xf32>
    %108 = vector.broadcast %0 : vector<1x1xf32> to vector<1x128xf32>
    %109 = arith.mulf %107, %108 : vector<1x128xf32>
    %c0_43 = arith.constant 0 : index
    %c0_44 = arith.constant 0 : index
    %110 = vector.load %arg14[%c0_43, %c0_44] : memref<1x128xf32, #tpu.memory_space<vmem>>, vector<1x128xf32>
    %cst_45 = arith.constant 9.99999974E-6 : f32
    %111 = vector.broadcast %cst_45 : f32 to vector<1x128xf32>
    %112 = arith.addf %109, %111 : vector<1x128xf32>
    %113 = math.rsqrt %112 : vector<1x128xf32>
    %114 = arith.mulf %110, %113 : vector<1x128xf32>
    %c0_46 = arith.constant 0 : index
    %c0_47 = arith.constant 0 : index
    %115 = vector.load %arg15[%c0_46, %c0_47] : memref<1x128xf32, #tpu.memory_space<vmem>>, vector<1x128xf32>
    %116 = arith.mulf %98, %114 : vector<1x128xf32>
    %117 = arith.subf %115, %116 : vector<1x128xf32>
    %118 = vector.broadcast %114 : vector<1x128xf32> to vector<16x128xf32>
    %119 = arith.mulf %90, %118 : vector<16x128xf32>
    %120 = vector.broadcast %117 : vector<1x128xf32> to vector<16x128xf32>
    %121 = arith.addf %119, %120 : vector<16x128xf32>
    %122 = arith.truncf %121 : vector<16x128xf32> to vector<16x128xbf16>
    %c0_48 = arith.constant 0 : index
    %c0_49 = arith.constant 0 : index
    %123 = vector.load %arg16[%c0_48, %c0_49] : memref<128x128xbf16, #tpu.memory_space<vmem>>, vector<128x128xbf16>
    %cst_50 = arith.constant dense<0.000000e+00> : vector<16x128xf32>
    %124 = tpu.matmul %122, %123, %cst_50 {dimension_numbers = #tpu.dot_dimension_numbers<[1], [0], [0], [1], [0, 0, 1, 1], [], []>} : vector<16x128xbf16>, vector<128x128xbf16>, vector<16x128xf32> -> vector<16x128xf32>
    %c0_51 = arith.constant 0 : index
    %c0_52 = arith.constant 0 : index
    %125 = vector.load %arg17[%c0_51, %c0_52] : memref<1x128xf32, #tpu.memory_space<vmem>>, vector<1x128xf32>
    %126 = vector.broadcast %125 : vector<1x128xf32> to vector<16x128xf32>
    %127 = arith.addf %124, %126 : vector<16x128xf32>
    %c0_53 = arith.constant 0 : index
    %c0_54 = arith.constant 0 : index
    %128 = vector.load %arg18[%c0_53, %c0_54] : memref<16x128xf32, #tpu.memory_space<vmem>>, vector<16x128xf32>
    tpu.vector_store %arg18[%c0_53, %c0_54], %127 {strides = array<i32>} : memref<16x128xf32, #tpu.memory_space<vmem>>, vector<16x128xf32>,
    return
  }
  func.func @transform_0(%arg0: i32, %arg1: memref<1xi32, #tpu.memory_space<smem>>) -> (i32, i32) {
    %c0_i32 = arith.constant 0 : i32
    %c0_i32_0 = arith.constant 0 : i32
    %c0_i32_1 = arith.constant 0 : i32
    return %c0_i32, %c0_i32_0 : i32, i32
  }
  func.func @transform_1(%arg0: i32, %arg1: memref<1xi32, #tpu.memory_space<smem>>) -> (i32, i32) {
    %c0_i32 = arith.constant 0 : i32
    %c0_i32_0 = arith.constant 0 : i32
    %c0_i32_1 = arith.constant 0 : i32
    return %c0_i32, %c0_i32_0 : i32, i32
  }
  func.func @transform_2(%arg0: i32, %arg1: memref<1xi32, #tpu.memory_space<smem>>) -> (i32, i32) {
    %c0_i32 = arith.constant 0 : i32
    %c0_i32_0 = arith.constant 0 : i32
    %c0_i32_1 = arith.constant 0 : i32
    return %c0_i32, %c0_i32_0 : i32, i32
  }
  func.func @transform_3(%arg0: i32, %arg1: memref<1xi32, #tpu.memory_space<smem>>) -> (i32, i32) {
    %c0_i32 = arith.constant 0 : i32
    %c0_i32_0 = arith.constant 0 : i32
    %c0_i32_1 = arith.constant 0 : i32
    return %c0_i32, %c0_i32_0 : i32, i32
  }
  func.func @transform_4(%arg0: i32, %arg1: memref<1xi32, #tpu.memory_space<smem>>) -> (i32, i32) {
    %c0_i32 = arith.constant 0 : i32
    %c0_i32_0 = arith.constant 0 : i32
    %c0_i32_1 = arith.constant 0 : i32
    return %c0_i32, %c0_i32_0 : i32, i32
  }
  func.func @transform_5(%arg0: i32, %arg1: memref<1xi32, #tpu.memory_space<smem>>) -> (i32, i32) {
    %c0_i32 = arith.constant 0 : i32
    %c0_i32_0 = arith.constant 0 : i32
    %c0_i32_1 = arith.constant 0 : i32
    return %c0_i32, %c0_i32_0 : i32, i32
  }
  func.func @transform_6(%arg0: i32, %arg1: memref<1xi32, #tpu.memory_space<smem>>) -> (i32, i32) {
    %c0_i32 = arith.constant 0 : i32
    %c0_i32_0 = arith.constant 0 : i32
    %c0_i32_1 = arith.constant 0 : i32
    return %c0_i32, %c0_i32_0 : i32, i32
  }
  func.func @transform_7(%arg0: i32, %arg1: memref<1xi32, #tpu.memory_space<smem>>) -> (i32, i32) {
    %c0_i32 = arith.constant 0 : i32
    %c0_i32_0 = arith.constant 0 : i32
    %c0_i32_1 = arith.constant 0 : i32
    return %c0_i32, %c0_i32_0 : i32, i32
  }
  func.func @transform_8(%arg0: i32, %arg1: memref<1xi32, #tpu.memory_space<smem>>) -> (i32, i32) {
    %c0_i32 = arith.constant 0 : i32
    %c0_i32_0 = arith.constant 0 : i32
    %c0_i32_1 = arith.constant 0 : i32
    return %c0_i32, %c0_i32_0 : i32, i32
  }
  func.func @transform_9(%arg0: i32, %arg1: memref<1xi32, #tpu.memory_space<smem>>) -> (i32, i32) {
    %c0_i32 = arith.constant 0 : i32
    %c0_i32_0 = arith.constant 0 : i32
    %c0_i32_1 = arith.constant 0 : i32
    return %c0_i32, %c0_i32_0 : i32, i32
  }
  func.func @transform_10(%arg0: i32, %arg1: memref<1xi32, #tpu.memory_space<smem>>) -> (i32, i32) {
    %c0_i32 = arith.constant 0 : i32
    %c0_i32_0 = arith.constant 0 : i32
    %c0_i32_1 = arith.constant 0 : i32
    return %c0_i32, %c0_i32_0 : i32, i32
  }
  func.func @transform_11(%arg0: i32, %arg1: memref<1xi32, #tpu.memory_space<smem>>) -> (i32, i32) {
    %c0_i32 = arith.constant 0 : i32
    %c0_i32_0 = arith.constant 0 : i32
    %c0_i32_1 = arith.constant 0 : i32
    return %c0_i32, %c0_i32_0 : i32, i32
  }
  func.func @transform_12(%arg0: i32, %arg1: memref<1xi32, #tpu.memory_space<smem>>) -> (i32, i32) {
    %c0_i32 = arith.constant 0 : i32
    %c0_i32_0 = arith.constant 0 : i32
    %c0_i32_1 = arith.constant 0 : i32
    return %c0_i32, %c0_i32_0 : i32, i32
  }
  func.func @transform_13(%arg0: i32, %arg1: memref<1xi32, #tpu.memory_space<smem>>) -> (i32, i32) {
    %c0_i32 = arith.constant 0 : i32
    %c0_i32_0 = arith.constant 0 : i32
    %c0_i32_1 = arith.constant 0 : i32
    return %c0_i32, %c0_i32_0 : i32, i32
  }
  func.func @transform_14(%arg0: i32, %arg1: memref<1xi32, #tpu.memory_space<smem>>) -> (i32, i32) {
    %c0_i32 = arith.constant 0 : i32
    %c0_i32_0 = arith.constant 0 : i32
    %c0_i32_1 = arith.constant 0 : i32
    return %c0_i32, %c0_i32_0 : i32, i32
  }
  func.func @transform_15(%arg0: i32, %arg1: memref<1xi32, #tpu.memory_space<smem>>) -> (i32, i32) {
    %c0_i32 = arith.constant 0 : i32
    %c0_i32_0 = arith.constant 0 : i32
    %c0_i32_1 = arith.constant 0 : i32
    return %c0_i32, %c0_i32_0 : i32, i32
  }
  func.func @transform_16(%arg0: i32, %arg1: memref<1xi32, #tpu.memory_space<smem>>) -> (i32, i32) {
    %c0_i32 = arith.constant 0 : i32
    %c0_i32_0 = arith.constant 0 : i32
    %c0_i32_1 = arith.constant 0 : i32
    return %c0_i32, %c0_i32_0 : i32, i32
  }
}

</mosaic_0001>

<llo_original>
// kernel: tpu_custom_call.1
$region0: #{tpu_custom_call.1}
  #allocation0 [shape = 'u32[]', space=smem, size = 0x4, offset = 0x4, fixed_abs, tag = 'smem constant byte address 0x4 - core index']
  #allocation1 [shape = 'u32[144,128]{1,0:T(1,128)}', space=vmem, size = 0x12000, scoped, tag = 'internal scratch']
  #allocation2 [shape = 's32[1]{0}', space=sflag, size = 0x4, scoped, tag = 'scoped memory for tpu_custom_call.1']
  #allocation3 [shape = 's32[1]{0:T(128)S(6)}', space=smem, size = 0x200, scoped, tag = 'prefetched SMEM operand 0']
  #allocation4 [shape = 'f32[1,1]{1,0:T(1,128)S(1)}', space=vmem, size = 0x200, scoped, tag = 'scoped memory for tpu_custom_call.1']
  %s0 = inlined_call_operand.<no memory space> [shape: s32[1], index: 0, kind: input, shape index: {}]
  %s1 = inlined_call_operand.<no memory space> [shape: f32[1,1], index: 1, kind: input, shape index: {}]
  %s2 = inlined_call_operand.hbm [shape: bf16[16,128], index: 2, kind: input, shape index: {}]
  %s3 = inlined_call_operand.hbm [shape: bf16[128,128], index: 3, kind: input, shape index: {}]
  %s4 = inlined_call_operand.vmem [shape: f32[1,128], index: 4, kind: input, shape index: {}]
  %s5 = inlined_call_operand.vmem [shape: f32[1,128], index: 5, kind: input, shape index: {}]
  %s6 = inlined_call_operand.vmem [shape: f32[1,128], index: 6, kind: input, shape index: {}]
  %s7 = inlined_call_operand.hbm [shape: bf16[128,128], index: 7, kind: input, shape index: {}]
  %s8 = inlined_call_operand.vmem [shape: f32[1,128], index: 8, kind: input, shape index: {}]
  %s9 = inlined_call_operand.vmem [shape: f32[1,128], index: 9, kind: input, shape index: {}]
  %s10 = inlined_call_operand.vmem [shape: f32[1,128], index: 10, kind: input, shape index: {}]
  %s11 = inlined_call_operand.hbm [shape: bf16[128,128], index: 11, kind: input, shape index: {}]
  %s12 = inlined_call_operand.vmem [shape: f32[1,128], index: 12, kind: input, shape index: {}]
  %s13 = inlined_call_operand.vmem [shape: f32[1,128], index: 13, kind: input, shape index: {}]
  %s14 = inlined_call_operand.vmem [shape: f32[1,128], index: 14, kind: input, shape index: {}]
  %s15 = inlined_call_operand.hbm [shape: bf16[128,128], index: 15, kind: input, shape index: {}]
  %s16 = inlined_call_operand.vmem [shape: f32[1,128], index: 16, kind: input, shape index: {}]
  %s17 = inlined_call_operand.hbm [shape: f32[16,128], index: 17, kind: output, shape index: {}]
  %s18 = sld [smem:[#allocation0]]
  $region94: #{tpu_custom_call.1} parent=0
    _
  %s20 = ssub.s32 1, %s18
  %s21 = scalar_select 0, %s20, %s18
  %22 = sst [smem:[#allocation3]] %s0
  %v23 = vstv %s1
  %24 = vst [vmem:[#allocation4] sm:$0x1] %v23
  $region1: #{tpu_custom_call.1} parent=0
    #allocation5 [shape = 'u8[4096]{0}', space=vmem, size = 0x1000, scoped, tag = 'input window, operand 2, single buffered']
    #allocation6 [shape = 's32[1]{0}', space=sflag, size = 0x4, scoped, tag = 'scoped memory for tpu_custom_call.1']
    #allocation7 [shape = 's32[1]{0}', space=sflag, size = 0x4, scoped, tag = 'scoped memory for tpu_custom_call.1']
    #allocation8 [shape = 'u8[32768]{0}', space=vmem, size = 0x8000, scoped, tag = 'input window, operand 3, single buffered']
    #allocation9 [shape = 's32[1]{0}', space=sflag, size = 0x4, scoped, tag = 'scoped memory for tpu_custom_call.1']
    #allocation10 [shape = 'u8[32768]{0}', space=vmem, size = 0x8000, scoped, tag = 'input window, operand 7, single buffered']
    #allocation11 [shape = 'u8[32768]{0}', space=vmem, size = 0x8000, scoped, tag = 'input window, operand 11, single buffered']
    #allocation12 [shape = 's32[1]{0}', space=sflag, size = 0x4, scoped, tag = 'scoped memory for tpu_custom_call.1']
    #allocation13 [shape = 'u8[32768]{0}', space=vmem, size = 0x8000, scoped, tag = 'input window, operand 15, single buffered']
    #allocation14 [shape = 'u8[8192]{0}', space=vmem, size = 0x2000, scoped, tag = 'output window, operand 0, single buffered']
    %25 = vsyncpa [#allocation6], 0
    %26 = vsyncpa [#allocation9], 0
    %27 = vsyncpa [#allocation12], 0
    %28 = vsyncpa [#allocation7], 0
    // Predicated region
    $region2: #{tpu_custom_call.1} parent=1 // pred_check
      _
    $region3: #{tpu_custom_call.1} parent=1 // pred_check_branch
      %30 = sbr.rel (0) target = $region5
    $region4: #{tpu_custom_call.1} parent=1 // pred_region
      _
    $region5: #{tpu_custom_call.1} parent=1 // pred_fallthru
      _
    // Predicated region
    $region6: #{tpu_custom_call.1} parent=1 // pred_check
      _
    $region7: #{tpu_custom_call.1} parent=1 // pred_check_branch
      %32 = sbr.rel (0) target = $region9
    $region8: #{tpu_custom_call.1} parent=1 // pred_region
      %s34 = ssub.s32 128, 128
      %35 = vsyncadd [#allocation6], %s34
      %s36 = sshll.u32 [#allocation5], 4
      %s37 = int_to_ptr.vmem [resolvable:$true] %s36
      %42 = dma.hbm_to_vmem [thread:$0]  %s2, 128, %s37, [#allocation6], 64, 64, 4
    $region9: #{tpu_custom_call.1} parent=1 // pred_fallthru
      _
    // Predicated region
    $region10: #{tpu_custom_call.1} parent=1 // pred_check
      _
    $region11: #{tpu_custom_call.1} parent=1 // pred_check_branch
      %44 = sbr.rel (0) target = $region13
    $region12: #{tpu_custom_call.1} parent=1 // pred_region
      %s46 = ssub.s32 1024, 1024
      %47 = vsyncadd [#allocation9], %s46
      %s48 = sshll.u32 [#allocation8], 4
      %s49 = int_to_ptr.vmem [resolvable:$true] %s48
      %54 = dma.hbm_to_vmem [thread:$0]  %s3, 1024, %s49, [#allocation9], 64, 64, 4
    $region13: #{tpu_custom_call.1} parent=1 // pred_fallthru
      _
    // Predicated region
    $region14: #{tpu_custom_call.1} parent=1 // pred_check
      _
    $region15: #{tpu_custom_call.1} parent=1 // pred_check_branch
      %56 = sbr.rel (0) target = $region17
    $region16: #{tpu_custom_call.1} parent=1 // pred_region
      _
    $region17: #{tpu_custom_call.1} parent=1 // pred_fallthru
      _
    // Predicated region
    $region18: #{tpu_custom_call.1} parent=1 // pred_check
      _
    $region19: #{tpu_custom_call.1} parent=1 // pred_check_branch
      %58 = sbr.rel (0) target = $region21
    $region20: #{tpu_custom_call.1} parent=1 // pred_region
      _
    $region21: #{tpu_custom_call.1} parent=1 // pred_fallthru
      _
    // Predicated region
    $region22: #{tpu_custom_call.1} parent=1 // pred_check
      _
    $region23: #{tpu_custom_call.1} parent=1 // pred_check_branch
      %60 = sbr.rel (0) target = $region25
    $region24: #{tpu_custom_call.1} parent=1 // pred_region
      _
    $region25: #{tpu_custom_call.1} parent=1 // pred_fallthru
      _
    // Predicated region
    $region26: #{tpu_custom_call.1} parent=1 // pred_check
      _
    $region27: #{tpu_custom_call.1} parent=1 // pred_check_branch
      %62 = sbr.rel (0) target = $region29
    $region28: #{tpu_custom_call.1} parent=1 // pred_region
      %s64 = ssub.s32 1024, 1024
      %65 = vsyncadd [#allocation9], %s64
      %s66 = sshll.u32 [#allocation10], 4
      %s67 = int_to_ptr.vmem [resolvable:$true] %s66
      %72 = dma.hbm_to_vmem [thread:$0]  %s7, 1024, %s67, [#allocation9], 64, 64, 4
    $region29: #{tpu_custom_call.1} parent=1 // pred_fallthru
      _
    // Predicated region
    $region30: #{tpu_custom_call.1} parent=1 // pred_check
      _
    $region31: #{tpu_custom_call.1} parent=1 // pred_check_branch
      %74 = sbr.rel (0) target = $region33
    $region32: #{tpu_custom_call.1} parent=1 // pred_region
      _
    $region33: #{tpu_custom_call.1} parent=1 // pred_fallthru
      _
    // Predicated region
    $region34: #{tpu_custom_call.1} parent=1 // pred_check
      _
    $region35: #{tpu_custom_call.1} parent=1 // pred_check_branch
      %76 = sbr.rel (0) target = $region37
    $region36: #{tpu_custom_call.1} parent=1 // pred_region
      _
    $region37: #{tpu_custom_call.1} parent=1 // pred_fallthru
      _
    // Predicated region
    $region38: #{tpu_custom_call.1} parent=1 // pred_check
      _
    $region39: #{tpu_custom_call.1} parent=1 // pred_check_branch
      %78 = sbr.rel (0) target = $region41
    $region40: #{tpu_custom_call.1} parent=1 // pred_region
      _
    $region41: #{tpu_custom_call.1} parent=1 // pred_fallthru
      _
    // Predicated region
    $region42: #{tpu_custom_call.1} parent=1 // pred_check
      _
    $region43: #{tpu_custom_call.1} parent=1 // pred_check_branch
      %80 = sbr.rel (0) target = $region45
    $region44: #{tpu_custom_call.1} parent=1 // pred_region
      %s82 = ssub.s32 1024, 1024
      %83 = vsyncadd [#allocation12], %s82
      %s84 = sshll.u32 [#allocation11], 4
      %s85 = int_to_ptr.vmem [resolvable:$true] %s84
      %90 = dma.hbm_to_vmem [thread:$0]  %s11, 1024, %s85, [#allocation12], 64, 64, 4
    $region45: #{tpu_custom_call.1} parent=1 // pred_fallthru
      _
    // Predicated region
    $region46: #{tpu_custom_call.1} parent=1 // pred_check
      _
    $region47: #{tpu_custom_call.1} parent=1 // pred_check_branch
      %92 = sbr.rel (0) target = $region49
    $region48: #{tpu_custom_call.1} parent=1 // pred_region
      _
    $region49: #{tpu_custom_call.1} parent=1 // pred_fallthru
      _
    // Predicated region
    $region50: #{tpu_custom_call.1} parent=1 // pred_check
      _
    $region51: #{tpu_custom_call.1} parent=1 // pred_check_branch
      %94 = sbr.rel (0) target = $region53
    $region52: #{tpu_custom_call.1} parent=1 // pred_region
      _
    $region53: #{tpu_custom_call.1} parent=1 // pred_fallthru
      _
    // Predicated region
    $region54: #{tpu_custom_call.1} parent=1 // pred_check
      _
    $region55: #{tpu_custom_call.1} parent=1 // pred_check_branch
      %96 = sbr.rel (0) target = $region57
    $region56: #{tpu_custom_call.1} parent=1 // pred_region
      _
    $region57: #{tpu_custom_call.1} parent=1 // pred_fallthru
      _
    // Predicated region
    $region58: #{tpu_custom_call.1} parent=1 // pred_check
      _
    $region59: #{tpu_custom_call.1} parent=1 // pred_check_branch
      %98 = sbr.rel (0) target = $region61
    $region60: #{tpu_custom_call.1} parent=1 // pred_region
      %s100 = ssub.s32 1024, 1024
      %101 = vsyncadd [#allocation12], %s100
      %s102 = sshll.u32 [#allocation13], 4
      %s103 = int_to_ptr.vmem [resolvable:$true] %s102
      %108 = dma.hbm_to_vmem [thread:$0]  %s15, 1024, %s103, [#allocation12], 64, 64, 4
    $region61: #{tpu_custom_call.1} parent=1 // pred_fallthru
      _
    // Predicated region
    $region62: #{tpu_custom_call.1} parent=1 // pred_check
      _
    $region63: #{tpu_custom_call.1} parent=1 // pred_check_branch
      %110 = sbr.rel (0) target = $region65
    $region64: #{tpu_custom_call.1} parent=1 // pred_region
      _
    $region65: #{tpu_custom_call.1} parent=1 // pred_fallthru
      _
    // Predicated region
    $region66: #{tpu_custom_call.1} parent=1 // pred_check
      _
    $region67: #{tpu_custom_call.1} parent=1 // pred_check_branch
      %112 = sbr.rel (0) target = $region69
    $region68: #{tpu_custom_call.1} parent=1 // pred_region
      %113 = dma.done [#allocation6], 128
    $region69: #{tpu_custom_call.1} parent=1 // pred_fallthru
      _
    // Predicated region
    $region70: #{tpu_custom_call.1} parent=1 // pred_check
      _
    $region71: #{tpu_custom_call.1} parent=1 // pred_check_branch
      %115 = sbr.rel (0) target = $region73
    $region72: #{tpu_custom_call.1} parent=1 // pred_region
      %116 = dma.done [#allocation9], 1024
    $region73: #{tpu_custom_call.1} parent=1 // pred_fallthru
      _
    // Predicated region
    $region74: #{tpu_custom_call.1} parent=1 // pred_check
      _
    $region75: #{tpu_custom_call.1} parent=1 // pred_check_branch
      %118 = sbr.rel (0) target = $region77
    $region76: #{tpu_custom_call.1} parent=1 // pred_region
      %119 = dma.done [#allocation9], 1024
    $region77: #{tpu_custom_call.1} parent=1 // pred_fallthru
      _
    // Predicated region
    $region78: #{tpu_custom_call.1} parent=1 // pred_check
      _
    $region79: #{tpu_custom_call.1} parent=1 // pred_check_branch
      %121 = sbr.rel (0) target = $region81
    $region80: #{tpu_custom_call.1} parent=1 // pred_region
      %122 = dma.done [#allocation12], 1024
    $region81: #{tpu_custom_call.1} parent=1 // pred_fallthru
      _
    // Predicated region
    $region82: #{tpu_custom_call.1} parent=1 // pred_check
      _
    $region83: #{tpu_custom_call.1} parent=1 // pred_check_branch
      %124 = sbr.rel (0) target = $region85
    $region84: #{tpu_custom_call.1} parent=1 // pred_region
      %125 = dma.done [#allocation12], 1024
    $region85: #{tpu_custom_call.1} parent=1 // pred_fallthru
      _
    %v127 = vld [vmem:[#allocation4] sm:$0x1]
    %v128 = vlaneseq
    %v129 = vshrl.u32 %v128, 7
    %v130 = vadd.s32 %v129, 8
    %s131 = sld [smem:[#allocation3]]
    %v132 = vstv %s131
    %vm133 = vcmp.lt.s32.totalorder %v129, %v132
    %vm134 = vcmp.lt.s32.totalorder %v130, %v132
    %v135 = vld [vmem:[#allocation5] sm:$0xf]
    %v136 = vld [vmem:[#allocation5 + $0x4] sm:$0xf]
    %v137 = vld [vmem:[#allocation8] sm:$0xf]
    %v138 = vld [vmem:[#allocation8 + $0x4] sm:$0xf]
    %v139 = vld [vmem:[#allocation8 + $0x8] sm:$0xf]
    %v140 = vld [vmem:[#allocation8 + $0xc] sm:$0xf]
    %v141 = vld [vmem:[#allocation8 + $0x10] sm:$0xf]
    %v142 = vld [vmem:[#allocation8 + $0x14] sm:$0xf]
    %v143 = vld [vmem:[#allocation8 + $0x18] sm:$0xf]
    %v144 = vld [vmem:[#allocation8 + $0x1c] sm:$0xf]
    %v145 = vld [vmem:[#allocation8 + $0x20] sm:$0xf]
    %v146 = vld [vmem:[#allocation8 + $0x24] sm:$0xf]
    %v147 = vld [vmem:[#allocation8 + $0x28] sm:$0xf]
    %v148 = vld [vmem:[#allocation8 + $0x2c] sm:$0xf]
    %v149 = vld [vmem:[#allocation8 + $0x30] sm:$0xf]
    %v150 = vld [vmem:[#allocation8 + $0x34] sm:$0xf]
    %v151 = vld [vmem:[#allocation8 + $0x38] sm:$0xf]
    %v152 = vld [vmem:[#allocation8 + $0x3c] sm:$0xf]
    %v153 = vld [vmem:[%s4] sm:$0x1]
    %v155 = vlaneseq
    %v156 = vshrl.u32 %v155, 7
    %v157 = vsub.s32 0, %v156
    %v158 = vrot.slane %v153, %v157
    %v162 = vunpack.c.l.b16 %v135
    %v163 = vunpack.c.l.b16 %v136
    %v164 = vpack.c.b16 %v163, %v162
    %v182 = vunpack.c.l.b16 %v137
    %v183 = vunpack.c.l.b16 %v138
    %v184 = vunpack.c.l.b16 %v139
    %v185 = vunpack.c.l.b16 %v140
    %v186 = vunpack.c.l.b16 %v141
    %v187 = vunpack.c.l.b16 %v142
    %v188 = vunpack.c.l.b16 %v143
    %v189 = vunpack.c.l.b16 %v144
    %v190 = vunpack.c.l.b16 %v145
    %v191 = vunpack.c.l.b16 %v146
    %v192 = vunpack.c.l.b16 %v147
    %v193 = vunpack.c.l.b16 %v148
    %v194 = vunpack.c.l.b16 %v149
    %v195 = vunpack.c.l.b16 %v150
    %v196 = vunpack.c.l.b16 %v151
    %v197 = vunpack.c.l.b16 %v152
    %v198 = vpack.c.b16 %v183, %v182
    %v199 = vpack.c.b16 %v185, %v184
    %v200 = vpack.c.b16 %v187, %v186
    %v201 = vpack.c.b16 %v189, %v188
    %v202 = vpack.c.b16 %v191, %v190
    %v203 = vpack.c.b16 %v193, %v192
    %v204 = vpack.c.b16 %v195, %v194
    %v205 = vpack.c.b16 %v197, %v196
    %214 = vmatprep.subr.bf16.mxu0 0
    %215 = vmatpush1.bf16.msra.mxu0 %v205
    %216 = vmatprep.subr.bf16.mxu0 0
    %217 = vmatpush1.bf16.msra.mxu0 %v204
    %218 = vmatprep.subr.bf16.mxu0 0
    %219 = vmatpush1.bf16.msra.mxu0 %v203
    %220 = vmatprep.subr.bf16.mxu0 0
    %221 = vmatpush1.bf16.msra.mxu0 %v202
    %222 = vmatprep.subr.bf16.mxu0 0
    %223 = vmatpush1.bf16.msra.mxu0 %v201
    %224 = vmatprep.subr.bf16.mxu0 0
    %225 = vmatpush1.bf16.msra.mxu0 %v200
    %226 = vmatprep.subr.bf16.mxu0 0
    %227 = vmatpush1.bf16.msra.mxu0 %v199
    %228 = vmatprep.subr.bf16.mxu0 0
    %229 = vmatpush1.bf16.msra.mxu0 %v198
    %230 = vmatprep.subr.bf16.mxu0 0
    %231 = vmatpush2.bf16.msra.mxu0 0
    %232 = vmatprep.subr.bf16.mxu0 0
    %233 = vmatpush2.bf16.msra.mxu0 0
    %234 = vmatprep.subr.bf16.mxu0 0
    %235 = vmatpush2.bf16.msra.mxu0 0
    %236 = vmatprep.subr.bf16.mxu0 0
    %237 = vmatpush2.bf16.msra.mxu0 0
    %238 = vmatprep.subr.bf16.mxu0 0
    %239 = vmatpush2.bf16.msra.mxu0 0
    %240 = vmatprep.subr.bf16.mxu0 0
    %241 = vmatpush2.bf16.msra.mxu0 0
    %242 = vmatprep.subr.bf16.mxu0 0
    %243 = vmatpush2.bf16.msra.mxu0 0
    %244 = vmatprep.subr.bf16.mxu0 0
    %245 = vmatpush2.bf16.msra.mxu0 0
    %246 = vmatprep.mubr.bf16.mxu0 0
    %247 = vmatmul.mubr.bf16.gmra.mxu0 %v164
    %v248 = vpop.f32.mrf.mxu0
    %v249 = vadd.f32 %v158, %v248
    %v250 = vpop.f32.mrf.mxu0
    %v251 = vpop.f32.mrf.mxu0
    %v252 = vadd.f32 %v158, %v251
    %v253 = vpop.f32.mrf.mxu0
    %254 = vdwg.mxu0
    %v255 = vmax.f32 %v249, 0.0
    %v256 = vmax.f32 %v252, 0.0
    %v257 = vsel %vm133, 1, 0
    %v258 = vsel %vm134, 1, 0
    %vm259 = vcmp.eq.s32.totalorder %v257, 1
    %vm260 = vcmp.eq.s32.totalorder %v258, 1
    %v261 = vsel %vm259, %v255, 0.0
    %v262 = vsel %vm260, %v256, 0.0
    %v263 = vadd.f32 %v261, %v262
    %v264 = vrot.slane %v263, 4
    %v265 = vadd.f32 %v263, %v264
    %v266 = vrot.slane %v265, 2
    %v267 = vadd.f32 %v265, %v266
    %v268 = vrot.slane %v267, 1
    %v269 = vadd.f32 %v267, %v268
    %271 = vset.pattern.permute.xlu0 0
    %272 = vperm.xlu0 %271, %v127
    %v273 = vpop.permute.xlu0 %272
    %v275 = vlaneseq
    %v276 = vshrl.u32 %v275, 7
    %v277 = vsub.s32 0, %v276
    %v278 = vrot.slane %v273, %v277
    %v279 = vmul.f32 %v269, %v278
    %v280 = vsub.f32 %v255, %v279
    %v281 = vsub.f32 %v256, %v279
    %v282 = vsel %vm259, %v280, 0.0
    %v283 = vsel %vm260, %v281, 0.0
    %v284 = vmul.f32 %v282, %v282
    %v285 = vmul.f32 %v283, %v283
    %v286 = vadd.f32 %v284, %v285
    %v287 = vrot.slane %v286, 4
    %v288 = vadd.f32 %v286, %v287
    %v289 = vrot.slane %v288, 2
    %v290 = vadd.f32 %v288, %v289
    %v291 = vrot.slane %v290, 1
    %v292 = vadd.f32 %v290, %v291
    %v293 = vmul.f32 %v292, %v278
    %v294 = vld [vmem:[%s5] sm:$0x1]
    %v295 = vadd.f32 %v293, 1e-05
    %v296 = vrsqrt.pop %v295
    %v297 = vmul.f32 %v294, %v296
    %v298 = vld [vmem:[%s6] sm:$0x1]
    %v299 = vmul.f32 %v279, %v297
    %v300 = vsub.f32 %v298, %v299
    %v302 = vlaneseq
    %v303 = vshrl.u32 %v302, 7
    %v304 = vsub.s32 0, %v303
    %v305 = vrot.slane %v297, %v304
    %v307 = vmul.f32 %v255, %v305
    %v308 = vmul.f32 %v256, %v305
    %v310 = vlaneseq
    %v311 = vshrl.u32 %v310, 7
    %v312 = vsub.s32 0, %v311
    %v313 = vrot.slane %v300, %v312
    %v315 = vadd.f32 %v307, %v313
    %v316 = vadd.f32 %v308, %v313
    %v317 = vpack.c.bf16 %v316, %v315
    %v318 = vld [vmem:[#allocation10] sm:$0xf]
    %v319 = vld [vmem:[#allocation10 + $0x4] sm:$0xf]
    %v320 = vld [vmem:[#allocation10 + $0x8] sm:$0xf]
    %v321 = vld [vmem:[#allocation10 + $0xc] sm:$0xf]
    %v322 = vld [vmem:[#allocation10 + $0x10] sm:$0xf]
    %v323 = vld [vmem:[#allocation10 + $0x14] sm:$0xf]
    %v324 = vld [vmem:[#allocation10 + $0x18] sm:$0xf]
    %v325 = vld [vmem:[#allocation10 + $0x1c] sm:$0xf]
    %v326 = vld [vmem:[#allocation10 + $0x20] sm:$0xf]
    %v327 = vld [vmem:[#allocation10 + $0x24] sm:$0xf]
    %v328 = vld [vmem:[#allocation10 + $0x28] sm:$0xf]
    %v329 = vld [vmem:[#allocation10 + $0x2c] sm:$0xf]
    %v330 = vld [vmem:[#allocation10 + $0x30] sm:$0xf]
    %v331 = vld [vmem:[#allocation10 + $0x34] sm:$0xf]
    %v332 = vld [vmem:[#allocation10 + $0x38] sm:$0xf]
    %v333 = vld [vmem:[#allocation10 + $0x3c] sm:$0xf]
    %v334 = vld [vmem:[%s8] sm:$0x1]
    %v336 = vlaneseq
    %v337 = vshrl.u32 %v336, 7
    %v338 = vsub.s32 0, %v337
    %v339 = vrot.slane %v334, %v338
    %v357 = vunpack.c.l.b16 %v318
    %v358 = vunpack.c.l.b16 %v319
    %v359 = vunpack.c.l.b16 %v320
    %v360 = vunpack.c.l.b16 %v321
    %v361 = vunpack.c.l.b16 %v322
    %v362 = vunpack.c.l.b16 %v323
    %v363 = vunpack.c.l.b16 %v324
    %v364 = vunpack.c.l.b16 %v325
    %v365 = vunpack.c.l.b16 %v326
    %v366 = vunpack.c.l.b16 %v327
    %v367 = vunpack.c.l.b16 %v328
    %v368 = vunpack.c.l.b16 %v329
    %v369 = vunpack.c.l.b16 %v330
    %v370 = vunpack.c.l.b16 %v331
    %v371 = vunpack.c.l.b16 %v332
    %v372 = vunpack.c.l.b16 %v333
    %v373 = vpack.c.b16 %v358, %v357
    %v374 = vpack.c.b16 %v360, %v359
    %v375 = vpack.c.b16 %v362, %v361
    %v376 = vpack.c.b16 %v364, %v363
    %v377 = vpack.c.b16 %v366, %v365
    %v378 = vpack.c.b16 %v368, %v367
    %v379 = vpack.c.b16 %v370, %v369
    %v380 = vpack.c.b16 %v372, %v371
    %389 = vmatprep.subr.bf16.mxu0 0
    %390 = vmatpush1.bf16.msra.mxu0 %v380
    %391 = vmatprep.subr.bf16.mxu0 0
    %392 = vmatpush1.bf16.msra.mxu0 %v379
    %393 = vmatprep.subr.bf16.mxu0 0
    %394 = vmatpush1.bf16.msra.mxu0 %v378
    %395 = vmatprep.subr.bf16.mxu0 0
    %396 = vmatpush1.bf16.msra.mxu0 %v377
    %397 = vmatprep.subr.bf16.mxu0 0
    %398 = vmatpush1.bf16.msra.mxu0 %v376
    %399 = vmatprep.subr.bf16.mxu0 0
    %400 = vmatpush1.bf16.msra.mxu0 %v375
    %401 = vmatprep.subr.bf16.mxu0 0
    %402 = vmatpush1.bf16.msra.mxu0 %v374
    %403 = vmatprep.subr.bf16.mxu0 0
    %404 = vmatpush1.bf16.msra.mxu0 %v373
    %405 = vmatprep.subr.bf16.mxu0 0
    %406 = vmatpush2.bf16.msra.mxu0 0
    %407 = vmatprep.subr.bf16.mxu0 0
    %408 = vmatpush2.bf16.msra.mxu0 0
    %409 = vmatprep.subr.bf16.mxu0 0
    %410 = vmatpush2.bf16.msra.mxu0 0
    %411 = vmatprep.subr.bf16.mxu0 0
    %412 = vmatpush2.bf16.msra.mxu0 0
    %413 = vmatprep.subr.bf16.mxu0 0
    %414 = vmatpush2.bf16.msra.mxu0 0
    %415 = vmatprep.subr.bf16.mxu0 0
    %416 = vmatpush2.bf16.msra.mxu0 0
    %417 = vmatprep.subr.bf16.mxu0 0
    %418 = vmatpush2.bf16.msra.mxu0 0
    %419 = vmatprep.subr.bf16.mxu0 0
    %420 = vmatpush2.bf16.msra.mxu0 0
    %421 = vmatprep.mubr.bf16.mxu0 0
    %422 = vmatmul.mubr.bf16.gmra.mxu0 %v317
    %v423 = vpop.f32.mrf.mxu0
    %v424 = vadd.f32 %v339, %v423
    %v425 = vpop.f32.mrf.mxu0
    %v426 = vpop.f32.mrf.mxu0
    %v427 = vadd.f32 %v339, %v426
    %v428 = vpop.f32.mrf.mxu0
    %429 = vdwg.mxu0
    %v430 = vmax.f32 %v424, 0.0
    %v431 = vmax.f32 %v427, 0.0
    %v432 = vsel %vm259, %v430, 0.0
    %v433 = vsel %vm260, %v431, 0.0
    %v434 = vadd.f32 %v432, %v433
    %v435 = vrot.slane %v434, 4
    %v436 = vadd.f32 %v434, %v435
    %v437 = vrot.slane %v436, 2
    %v438 = vadd.f32 %v436, %v437
    %v439 = vrot.slane %v438, 1
    %v440 = vadd.f32 %v438, %v439
    %v441 = vmul.f32 %v440, %v278
    %v442 = vsub.f32 %v430, %v441
    %v443 = vsub.f32 %v431, %v441
    %v444 = vsel %vm259, %v442, 0.0
    %v445 = vsel %vm260, %v443, 0.0
    %v446 = vmul.f32 %v444, %v444
    %v447 = vmul.f32 %v445, %v445
    %v448 = vadd.f32 %v446, %v447
    %v449 = vrot.slane %v448, 4
    %v450 = vadd.f32 %v448, %v449
    %v451 = vrot.slane %v450, 2
    %v452 = vadd.f32 %v450, %v451
    %v453 = vrot.slane %v452, 1
    %v454 = vadd.f32 %v452, %v453
    %v455 = vmul.f32 %v454, %v278
    %v456 = vld [vmem:[%s9] sm:$0x1]
    %v457 = vadd.f32 %v455, 1e-05
    %v458 = vrsqrt.pop %v457
    %v459 = vmul.f32 %v456, %v458
    %v460 = vld [vmem:[%s10] sm:$0x1]
    %v461 = vmul.f32 %v441, %v459
    %v462 = vsub.f32 %v460, %v461
    %v464 = vlaneseq
    %v465 = vshrl.u32 %v464, 7
    %v466 = vsub.s32 0, %v465
    %v467 = vrot.slane %v459, %v466
    %v469 = vmul.f32 %v430, %v467
    %v470 = vmul.f32 %v431, %v467
    %v472 = vlaneseq
    %v473 = vshrl.u32 %v472, 7
    %v474 = vsub.s32 0, %v473
    %v475 = vrot.slane %v462, %v474
    %v477 = vadd.f32 %v469, %v475
    %v478 = vadd.f32 %v470, %v475
    %v479 = vpack.c.bf16 %v478, %v477
    %v480 = vld [vmem:[#allocation11] sm:$0xf]
    %v481 = vld [vmem:[#allocation11 + $0x4] sm:$0xf]
    %v482 = vld [vmem:[#allocation11 + $0x8] sm:$0xf]
    %v483 = vld [vmem:[#allocation11 + $0xc] sm:$0xf]
    %v484 = vld [vmem:[#allocation11 + $0x10] sm:$0xf]
    %v485 = vld [vmem:[#allocation11 + $0x14] sm:$0xf]
    %v486 = vld [vmem:[#allocation11 + $0x18] sm:$0xf]
    %v487 = vld [vmem:[#allocation11 + $0x1c] sm:$0xf]
    %v488 = vld [vmem:[#allocation11 + $0x20] sm:$0xf]
    %v489 = vld [vmem:[#allocation11 + $0x24] sm:$0xf]
    %v490 = vld [vmem:[#allocation11 + $0x28] sm:$0xf]
    %v491 = vld [vmem:[#allocation11 + $0x2c] sm:$0xf]
    %v492 = vld [vmem:[#allocation11 + $0x30] sm:$0xf]
    %v493 = vld [vmem:[#allocation11 + $0x34] sm:$0xf]
    %v494 = vld [vmem:[#allocation11 + $0x38] sm:$0xf]
    %v495 = vld [vmem:[#allocation11 + $0x3c] sm:$0xf]
    %v496 = vld [vmem:[%s12] sm:$0x1]
    %v498 = vlaneseq
    %v499 = vshrl.u32 %v498, 7
    %v500 = vsub.s32 0, %v499
    %v501 = vrot.slane %v496, %v500
    %v519 = vunpack.c.l.b16 %v480
    %v520 = vunpack.c.l.b16 %v481
    %v521 = vunpack.c.l.b16 %v482
    %v522 = vunpack.c.l.b16 %v483
    %v523 = vunpack.c.l.b16 %v484
    %v524 = vunpack.c.l.b16 %v485
    %v525 = vunpack.c.l.b16 %v486
    %v526 = vunpack.c.l.b16 %v487
    %v527 = vunpack.c.l.b16 %v488
    %v528 = vunpack.c.l.b16 %v489
    %v529 = vunpack.c.l.b16 %v490
    %v530 = vunpack.c.l.b16 %v491
    %v531 = vunpack.c.l.b16 %v492
    %v532 = vunpack.c.l.b16 %v493
    %v533 = vunpack.c.l.b16 %v494
    %v534 = vunpack.c.l.b16 %v495
    %v535 = vpack.c.b16 %v520, %v519
    %v536 = vpack.c.b16 %v522, %v521
    %v537 = vpack.c.b16 %v524, %v523
    %v538 = vpack.c.b16 %v526, %v525
    %v539 = vpack.c.b16 %v528, %v527
    %v540 = vpack.c.b16 %v530, %v529
    %v541 = vpack.c.b16 %v532, %v531
    %v542 = vpack.c.b16 %v534, %v533
    %551 = vmatprep.subr.bf16.mxu0 0
    %552 = vmatpush1.bf16.msra.mxu0 %v542
    %553 = vmatprep.subr.bf16.mxu0 0
    %554 = vmatpush1.bf16.msra.mxu0 %v541
    %555 = vmatprep.subr.bf16.mxu0 0
    %556 = vmatpush1.bf16.msra.mxu0 %v540
    %557 = vmatprep.subr.bf16.mxu0 0
    %558 = vmatpush1.bf16.msra.mxu0 %v539
    %559 = vmatprep.subr.bf16.mxu0 0
    %560 = vmatpush1.bf16.msra.mxu0 %v538
    %561 = vmatprep.subr.bf16.mxu0 0
    %562 = vmatpush1.bf16.msra.mxu0 %v537
    %563 = vmatprep.subr.bf16.mxu0 0
    %564 = vmatpush1.bf16.msra.mxu0 %v536
    %565 = vmatprep.subr.bf16.mxu0 0
    %566 = vmatpush1.bf16.msra.mxu0 %v535
    %567 = vmatprep.subr.bf16.mxu0 0
    %568 = vmatpush2.bf16.msra.mxu0 0
    %569 = vmatprep.subr.bf16.mxu0 0
    %570 = vmatpush2.bf16.msra.mxu0 0
    %571 = vmatprep.subr.bf16.mxu0 0
    %572 = vmatpush2.bf16.msra.mxu0 0
    %573 = vmatprep.subr.bf16.mxu0 0
    %574 = vmatpush2.bf16.msra.mxu0 0
    %575 = vmatprep.subr.bf16.mxu0 0
    %576 = vmatpush2.bf16.msra.mxu0 0
    %577 = vmatprep.subr.bf16.mxu0 0
    %578 = vmatpush2.bf16.msra.mxu0 0
    %579 = vmatprep.subr.bf16.mxu0 0
    %580 = vmatpush2.bf16.msra.mxu0 0
    %581 = vmatprep.subr.bf16.mxu0 0
    %582 = vmatpush2.bf16.msra.mxu0 0
    %583 = vmatprep.mubr.bf16.mxu0 0
    %584 = vmatmul.mubr.bf16.gmra.mxu0 %v479
    %v585 = vpop.f32.mrf.mxu0
    %v586 = vadd.f32 %v501, %v585
    %v587 = vpop.f32.mrf.mxu0
    %v588 = vpop.f32.mrf.mxu0
    %v589 = vadd.f32 %v501, %v588
    %v590 = vpop.f32.mrf.mxu0
    %591 = vdwg.mxu0
    %v592 = vmax.f32 %v586, 0.0
    %v593 = vmax.f32 %v589, 0.0
    %v594 = vsel %vm259, %v592, 0.0
    %v595 = vsel %vm260, %v593, 0.0
    %v596 = vadd.f32 %v594, %v595
    %v597 = vrot.slane %v596, 4
    %v598 = vadd.f32 %v596, %v597
    %v599 = vrot.slane %v598, 2
    %v600 = vadd.f32 %v598, %v599
    %v601 = vrot.slane %v600, 1
    %v602 = vadd.f32 %v600, %v601
    %v603 = vmul.f32 %v602, %v278
    %v604 = vsub.f32 %v592, %v603
    %v605 = vsub.f32 %v593, %v603
    %v606 = vsel %vm259, %v604, 0.0
    %v607 = vsel %vm260, %v605, 0.0
    %v608 = vmul.f32 %v606, %v606
    %v609 = vmul.f32 %v607, %v607
    %v610 = vadd.f32 %v608, %v609
    %v611 = vrot.slane %v610, 4
    %v612 = vadd.f32 %v610, %v611
    %v613 = vrot.slane %v612, 2
    %v614 = vadd.f32 %v612, %v613
    %v615 = vrot.slane %v614, 1
    %v616 = vadd.f32 %v614, %v615
    %v617 = vmul.f32 %v616, %v278
    %v618 = vld [vmem:[%s13] sm:$0x1]
    %v619 = vadd.f32 %v617, 1e-05
    %v620 = vrsqrt.pop %v619
    %v621 = vmul.f32 %v618, %v620
    %v622 = vld [vmem:[%s14] sm:$0x1]
    %v623 = vmul.f32 %v603, %v621
    %v624 = vsub.f32 %v622, %v623
    %v626 = vlaneseq
    %v627 = vshrl.u32 %v626, 7
    %v628 = vsub.s32 0, %v627
    %v629 = vrot.slane %v621, %v628
    %v631 = vmul.f32 %v592, %v629
    %v632 = vmul.f32 %v593, %v629
    %v634 = vlaneseq
    %v635 = vshrl.u32 %v634, 7
    %v636 = vsub.s32 0, %v635
    %v637 = vrot.slane %v624, %v636
    %v639 = vadd.f32 %v631, %v637
    %v640 = vadd.f32 %v632, %v637
    %v641 = vpack.c.bf16 %v640, %v639
    %v642 = vld [vmem:[#allocation13] sm:$0xf]
    %v643 = vld [vmem:[#allocation13 + $0x4] sm:$0xf]
    %v644 = vld [vmem:[#allocation13 + $0x8] sm:$0xf]
    %v645 = vld [vmem:[#allocation13 + $0xc] sm:$0xf]
    %v646 = vld [vmem:[#allocation13 + $0x10] sm:$0xf]
    %v647 = vld [vmem:[#allocation13 + $0x14] sm:$0xf]
    %v648 = vld [vmem:[#allocation13 + $0x18] sm:$0xf]
    %v649 = vld [vmem:[#allocation13 + $0x1c] sm:$0xf]
    %v650 = vld [vmem:[#allocation13 + $0x20] sm:$0xf]
    %v651 = vld [vmem:[#allocation13 + $0x24] sm:$0xf]
    %v652 = vld [vmem:[#allocation13 + $0x28] sm:$0xf]
    %v653 = vld [vmem:[#allocation13 + $0x2c] sm:$0xf]
    %v654 = vld [vmem:[#allocation13 + $0x30] sm:$0xf]
    %v655 = vld [vmem:[#allocation13 + $0x34] sm:$0xf]
    %v656 = vld [vmem:[#allocation13 + $0x38] sm:$0xf]
    %v657 = vld [vmem:[#allocation13 + $0x3c] sm:$0xf]
    %v658 = vld [vmem:[%s16] sm:$0x1]
    %v660 = vlaneseq
    %v661 = vshrl.u32 %v660, 7
    %v662 = vsub.s32 0, %v661
    %v663 = vrot.slane %v658, %v662
    %v681 = vunpack.c.l.b16 %v642
    %v682 = vunpack.c.l.b16 %v643
    %v683 = vunpack.c.l.b16 %v644
    %v684 = vunpack.c.l.b16 %v645
    %v685 = vunpack.c.l.b16 %v646
    %v686 = vunpack.c.l.b16 %v647
    %v687 = vunpack.c.l.b16 %v648
    %v688 = vunpack.c.l.b16 %v649
    %v689 = vunpack.c.l.b16 %v650
    %v690 = vunpack.c.l.b16 %v651
    %v691 = vunpack.c.l.b16 %v652
    %v692 = vunpack.c.l.b16 %v653
    %v693 = vunpack.c.l.b16 %v654
    %v694 = vunpack.c.l.b16 %v655
    %v695 = vunpack.c.l.b16 %v656
    %v696 = vunpack.c.l.b16 %v657
    %v697 = vpack.c.b16 %v682, %v681
    %v698 = vpack.c.b16 %v684, %v683
    %v699 = vpack.c.b16 %v686, %v685
    %v700 = vpack.c.b16 %v688, %v687
    %v701 = vpack.c.b16 %v690, %v689
    %v702 = vpack.c.b16 %v692, %v691
    %v703 = vpack.c.b16 %v694, %v693
    %v704 = vpack.c.b16 %v696, %v695
    %713 = vmatprep.subr.bf16.mxu0 0
    %714 = vmatpush1.bf16.msra.mxu0 %v704
    %715 = vmatprep.subr.bf16.mxu0 0
    %716 = vmatpush1.bf16.msra.mxu0 %v703
    %717 = vmatprep.subr.bf16.mxu0 0
    %718 = vmatpush1.bf16.msra.mxu0 %v702
    %719 = vmatprep.subr.bf16.mxu0 0
    %720 = vmatpush1.bf16.msra.mxu0 %v701
    %721 = vmatprep.subr.bf16.mxu0 0
    %722 = vmatpush1.bf16.msra.mxu0 %v700
    %723 = vmatprep.subr.bf16.mxu0 0
    %724 = vmatpush1.bf16.msra.mxu0 %v699
    %725 = vmatprep.subr.bf16.mxu0 0
    %726 = vmatpush1.bf16.msra.mxu0 %v698
    %727 = vmatprep.subr.bf16.mxu0 0
    %728 = vmatpush1.bf16.msra.mxu0 %v697
    %729 = vmatprep.subr.bf16.mxu0 0
    %730 = vmatpush2.bf16.msra.mxu0 0
    %731 = vmatprep.subr.bf16.mxu0 0
    %732 = vmatpush2.bf16.msra.mxu0 0
    %733 = vmatprep.subr.bf16.mxu0 0
    %734 = vmatpush2.bf16.msra.mxu0 0
    %735 = vmatprep.subr.bf16.mxu0 0
    %736 = vmatpush2.bf16.msra.mxu0 0
    %737 = vmatprep.subr.bf16.mxu0 0
    %738 = vmatpush2.bf16.msra.mxu0 0
    %739 = vmatprep.subr.bf16.mxu0 0
    %740 = vmatpush2.bf16.msra.mxu0 0
    %741 = vmatprep.subr.bf16.mxu0 0
    %742 = vmatpush2.bf16.msra.mxu0 0
    %743 = vmatprep.subr.bf16.mxu0 0
    %744 = vmatpush2.bf16.msra.mxu0 0
    %745 = vmatprep.mubr.bf16.mxu0 0
    %746 = vmatmul.mubr.bf16.gmra.mxu0 %v641
    %v747 = vpop.f32.mrf.mxu0
    %v748 = vadd.f32 %v663, %v747
    %v749 = vpop.f32.mrf.mxu0
    %v750 = vpop.f32.mrf.mxu0
    %v751 = vadd.f32 %v663, %v750
    %v752 = vpop.f32.mrf.mxu0
    %753 = vdwg.mxu0
    %754 = vst [vmem:[#allocation14] sm:$0xff] %v748
    %755 = vst [vmem:[#allocation14 + $0x8] sm:$0xff] %v751
    // Predicated region
    $region86: #{tpu_custom_call.1} parent=1 // pred_check
      _
    $region87: #{tpu_custom_call.1} parent=1 // pred_check_branch
      %757 = sbr.rel (0) target = $region89
    $region88: #{tpu_custom_call.1} parent=1 // pred_region
      %s759 = ssub.s32 256, 256
      %760 = vsyncadd [#allocation7], %s759
      %s761 = sshll.u32 [#allocation14], 4
      %s762 = int_to_ptr.vmem [resolvable:$true] %s761
      %767 = dma.vmem_to_hbm [thread:$0]  %s762, 256, %s17, [#allocation7], 128, 128, 8
    $region89: #{tpu_custom_call.1} parent=1 // pred_fallthru
      _
    // Predicated region
    $region90: #{tpu_custom_call.1} parent=1 // pred_check
      _
    $region91: #{tpu_custom_call.1} parent=1 // pred_check_branch
      %769 = sbr.rel (0) target = $region93
    $region92: #{tpu_custom_call.1} parent=1 // pred_region
      %770 = dma.done [#allocation7], 256
    $region93: #{tpu_custom_call.1} parent=1 // pred_fallthru
      _
    %771 = vsyncpa [#allocation6], 1
    %772 = vsyncpa [#allocation9], 1
    %773 = vsyncpa [#allocation12], 1
    %774 = vsyncpa [#allocation7], 1

</llo_original>
